<compile_context>
chip_gen: v7x
topology: tpu7x:2x2x1
jax: 0.10.0
libtpu: 0.0.40
codegen_flags: <defaults>
</compile_context>

<pallas_src>
import jax
import jax.numpy as jnp
from jax.experimental import pallas as pl
from jax.experimental.pallas import tpu as pltpu

N_INPUT = 128
N_HIDDEN1 = 128
N_HIDDEN2 = 64
N_HIDDEN2_PAD = 128          # pad hidden2 to full lane width
N_OUTPUT = 1
LEAKY_SLOPE = 0.01           # torch.nn.LeakyReLU default
DEFAULT_TILE_B = 4096        # batch tile (multiple of 1024)


def _leaky_relu(x):
    return jnp.where(x > 0, x, LEAKY_SLOPE * x)


def _round_up(n, m):
    return ((n + m - 1) // m) * m


def _choose_tile_b(batch, max_tile_b):
    """Pick a batch tile: multiple of 128 (lane-dense out), multiple of 1024
    whenever the grid has >1 step (so the out block's sublane dim is a
    multiple of 8), and small enough to keep >=2 grid steps for large B."""
    max_tile_b = max(1024, _round_up(max_tile_b, 1024))
    if batch <= 1024:
        return _round_up(max(batch, 1), 128)      # single tile
    return min(max_tile_b, _round_up(pl.cdiv(batch, 2), 1024))


def fnd_kernel(x_ref, w1_ref, w2_ref, c_ref, o_ref):
    # x tile: (TB, 128) in its HBM dtype; cast to bf16 on-chip for the MXU.
    x = x_ref[...].astype(jnp.bfloat16)

    b1 = c_ref[0:1, :]        # (1, 128) f32
    b2 = c_ref[1:2, :]        # (1, 128) f32, cols >= 64 are 0
    w3 = c_ref[2:3, :]        # (1, 128) f32, cols >= 64 are 0
    b3 = c_ref[3:4, :]        # (1, 128) f32, b3 replicated across lanes

    # layer_1 + LeakyReLU (bf16 MXU operands, f32 accumulate)
    h1 = jnp.dot(x, w1_ref[...], preferred_element_type=jnp.float32)
    h1 = _leaky_relu(h1 + b1)

    # layer_2 + LeakyReLU + Tanh (hidden2 zero-padded to 128 lanes)
    h2 = jnp.dot(h1.astype(jnp.bfloat16), w2_ref[...],
                 preferred_element_type=jnp.float32)
    h2 = jnp.tanh(_leaky_relu(h2 + b2))

    # layer_out (padded 128 -> 1): VPU multiply + XLU lane reduce, repacked
    # lane-dense so the bias add, sigmoid and store use full 128-lane vregs.
    rows = o_ref.shape[0]                              # TB // 128
    prod = h2 * w3                                     # (TB, 128) f32
    out = jnp.sum(prod.reshape(rows, 128, N_HIDDEN2_PAD), axis=-1) + b3
    o_ref[...] = jax.nn.sigmoid(out).astype(o_ref.dtype)


def fnd_forward(x, kparams, *, tile_b=DEFAULT_TILE_B):
    """x: (B, N_INPUT), any float dtype. Returns (B, N_OUTPUT) float32."""
    B = x.shape[0]
    TB = _choose_tile_b(B, tile_b)
    G = pl.cdiv(B, TB)
    R = TB // 128                      # output rows per tile (lane-dense)

    out = pl.pallas_call(
        fnd_kernel,
        out_shape=jax.ShapeDtypeStruct((G * R, 128), jnp.float32),
        grid=(G,),
        in_specs=[
            pl.BlockSpec((TB, N_INPUT), lambda i: (i, 0)),          # x tiled
            pl.BlockSpec((N_INPUT, N_HIDDEN1), lambda i: (0, 0)),   # w1 resident
            pl.BlockSpec((N_HIDDEN1, N_HIDDEN2_PAD), lambda i: (0, 0)),  # w2 resident
            pl.BlockSpec((4, 128), lambda i: (0, 0)),               # packed consts
        ],
        out_specs=pl.BlockSpec((R, 128), lambda i: (i, 0)),
        compiler_params=pltpu.CompilerParams(
            dimension_semantics=("parallel",),
            vmem_limit_bytes=48 * 1024 * 1024,
        ),
    )(x, kparams["w1"], kparams["w2"], kparams["consts"])

    # Lane-dense (G*R, 128) -> flat batch order -> drop padded tail rows.
    return out.reshape(-1)[:B].reshape(B, N_OUTPUT)


def init_params(key):
    """f32 "torch-like" params: U(-1/sqrt(in), 1/sqrt(in)).

    w1/w2 stored pre-transposed as (in_features, out_features); final layer
    weight as a (1, in_features) row; biases as (1, out_features)."""
    keys = jax.random.split(key, 6)

    def linear(kw, kb, n_in, n_out, transpose=True):
        bound = 1.0 / jnp.sqrt(jnp.float32(n_in))
        shape = (n_in, n_out) if transpose else (n_out, n_in)
        w = jax.random.uniform(kw, shape, jnp.float32, -bound, bound)
        b = jax.random.uniform(kb, (1, n_out), jnp.float32, -bound, bound)
        return w, b

    w1, b1 = linear(keys[0], keys[1], N_INPUT, N_HIDDEN1)
    w2, b2 = linear(keys[2], keys[3], N_HIDDEN1, N_HIDDEN2)
    w3, b3 = linear(keys[4], keys[5], N_HIDDEN2, N_OUTPUT, transpose=False)
    return {"w1": w1, "b1": b1, "w2": w2, "b2": b2, "w3": w3, "b3": b3}


def prepare_params(p):
    """One-time kernel-side layout: bf16 weights, hidden2 padded to 128,
    all small constants packed into a single (4, 128) f32 array."""
    w1 = p["w1"].astype(jnp.bfloat16)
    w2 = jnp.zeros((N_HIDDEN1, N_HIDDEN2_PAD), jnp.bfloat16)
    w2 = w2.at[:, :N_HIDDEN2].set(p["w2"].astype(jnp.bfloat16))

    consts = jnp.zeros((4, 128), jnp.float32)
    consts = consts.at[0, :].set(p["b1"][0])                 # b1
    consts = consts.at[1, :N_HIDDEN2].set(p["b2"][0])        # b2 (padded)
    consts = consts.at[2, :N_HIDDEN2].set(p["w3"][0])        # w3 row (padded)
    consts = consts.at[3, :].set(p["b3"][0, 0])              # b3 replicated
    return {"w1": w1, "w2": w2, "consts": consts}


def fnd_reference(x, p):
    """Pure-JAX reference with the same bf16-operand / f32-accumulate policy."""
    xb = x.astype(jnp.bfloat16)
    h1 = _leaky_relu(
        jnp.dot(xb, p["w1"].astype(jnp.bfloat16),
                preferred_element_type=jnp.float32) + p["b1"])
    h2 = jnp.dot(h1.astype(jnp.bfloat16), p["w2"].astype(jnp.bfloat16),
                 preferred_element_type=jnp.float32)
    h2 = jnp.tanh(_leaky_relu(h2 + p["b2"]))
    out = jnp.sum(h2 * p["w3"], axis=-1, keepdims=True) + p["b3"]
    return jax.nn.sigmoid(out)


if __name__ == "__main__":
    key = jax.random.PRNGKey(0)
    k_x, k_x2, k_p = jax.random.split(key, 3)
    params = init_params(k_p)
    kparams = prepare_params(params)

    # Small case: single tile / single grid step.
    B = 8
    x = jax.random.normal(k_x, (B, N_INPUT), dtype=jnp.float32)
    out = jax.block_until_ready(fnd_forward(x, kparams))
    ref = fnd_reference(x, params)
    assert out.shape == (B, N_OUTPUT), out.shape
    assert jnp.allclose(out, ref, atol=2e-3, rtol=2e-3), (
        f"max abs diff {jnp.max(jnp.abs(out - ref))}"
    )

    # Larger case: exercises grid > 1 and the ragged tail tile.
    B2 = 1040
    x2 = jax.random.normal(k_x2, (B2, N_INPUT), dtype=jnp.float32)
    out2 = jax.block_until_ready(fnd_forward(x2, kparams))
    ref2 = fnd_reference(x2, params)
    assert out2.shape == (B2, N_OUTPUT), out2.shape
    assert jnp.allclose(out2, ref2, atol=2e-3, rtol=2e-3), (
        f"max abs diff {jnp.max(jnp.abs(out2 - ref2))}"
    )

    print("KERNEL_OK")
</pallas_src>

<mosaic_0001>
module attributes {stable_mosaic.version = 11 : i64} {
  func.func @fnd_kernel(%arg0: i32, %arg1: memref<128x128xf32, #tpu.memory_space<vmem>>, %arg2: memref<128x128xbf16, #tpu.memory_space<vmem>>, %arg3: memref<128x128xbf16, #tpu.memory_space<vmem>>, %arg4: memref<4x128xf32, #tpu.memory_space<vmem>>, %arg5: memref<1x128xf32, #tpu.memory_space<vmem>>) attributes {dimension_semantics = [#tpu.dimension_semantics<parallel>], iteration_bounds = array<i64: 1>, scalar_prefetch = 0 : i64, scratch_operands = 0 : i64, tpu.core_type = #tpu.core_type<tc>, window_params = [{transform_indices = @transform_0, window_bounds = array<i64: 128, 128>}, {pipeline_mode = #tpu.pipeline_mode<synchronous>, transform_indices = @transform_1, window_bounds = array<i64: 128, 128>}, {pipeline_mode = #tpu.pipeline_mode<synchronous>, transform_indices = @transform_2, window_bounds = array<i64: 128, 128>}, {pipeline_mode = #tpu.pipeline_mode<synchronous>, transform_indices = @transform_3, window_bounds = array<i64: 4, 128>}, {transform_indices = @transform_4, window_bounds = array<i64: 1, 128>}]} {
    %c0 = arith.constant 0 : index
    %c0_0 = arith.constant 0 : index
    %0 = vector.load %arg1[%c0, %c0_0] : memref<128x128xf32, #tpu.memory_space<vmem>>, vector<128x128xf32>
    %1 = arith.truncf %0 : vector<128x128xf32> to vector<128x128xbf16>
    %c0_1 = arith.constant 0 : index
    %c0_2 = arith.constant 0 : index
    %2 = vector.load %arg4[%c0_1, %c0_2] : memref<4x128xf32, #tpu.memory_space<vmem>>, vector<1x128xf32>
    %c1 = arith.constant 1 : index
    %c0_3 = arith.constant 0 : index
    %3 = vector.load %arg4[%c1, %c0_3] : memref<4x128xf32, #tpu.memory_space<vmem>>, vector<1x128xf32>
    %c2 = arith.constant 2 : index
    %c0_4 = arith.constant 0 : index
    %4 = vector.load %arg4[%c2, %c0_4] : memref<4x128xf32, #tpu.memory_space<vmem>>, vector<1x128xf32>
    %c3 = arith.constant 3 : index
    %c0_5 = arith.constant 0 : index
    %5 = vector.load %arg4[%c3, %c0_5] : memref<4x128xf32, #tpu.memory_space<vmem>>, vector<1x128xf32>
    %c0_6 = arith.constant 0 : index
    %c0_7 = arith.constant 0 : index
    %6 = vector.load %arg2[%c0_6, %c0_7] : memref<128x128xbf16, #tpu.memory_space<vmem>>, vector<128x128xbf16>
    %cst = arith.constant dense<0.000000e+00> : vector<128x128xf32>
    %7 = tpu.matmul %1, %6, %cst {dimension_numbers = #tpu.dot_dimension_numbers<[1], [0], [0], [1], [0, 0, 1, 1], [], []>} : vector<128x128xbf16>, vector<128x128xbf16>, vector<128x128xf32> -> vector<128x128xf32>
    %8 = vector.broadcast %2 : vector<1x128xf32> to vector<128x128xf32>
    %9 = arith.addf %7, %8 : vector<128x128xf32>
    %cst_8 = arith.constant 0.000000e+00 : f32
    %10 = vector.broadcast %cst_8 : f32 to vector<128x128xf32>
    %11 = arith.cmpf ogt, %9, %10 : vector<128x128xf32>
    %cst_9 = arith.constant 0.00999999977 : f32
    %12 = vector.broadcast %cst_9 : f32 to vector<128x128xf32>
    %13 = arith.mulf %12, %9 : vector<128x128xf32>
    %14 = arith.select %11, %9, %13 : vector<128x128xi1>, vector<128x128xf32>
    %15 = arith.truncf %14 : vector<128x128xf32> to vector<128x128xbf16>
    %c0_10 = arith.constant 0 : index
    %c0_11 = arith.constant 0 : index
    %16 = vector.load %arg3[%c0_10, %c0_11] : memref<128x128xbf16, #tpu.memory_space<vmem>>, vector<128x128xbf16>
    %cst_12 = arith.constant dense<0.000000e+00> : vector<128x128xf32>
    %17 = tpu.matmul %15, %16, %cst_12 {dimension_numbers = #tpu.dot_dimension_numbers<[1], [0], [0], [1], [0, 0, 1, 1], [], []>} : vector<128x128xbf16>, vector<128x128xbf16>, vector<128x128xf32> -> vector<128x128xf32>
    %18 = vector.broadcast %3 : vector<1x128xf32> to vector<128x128xf32>
    %19 = arith.addf %17, %18 : vector<128x128xf32>
    %cst_13 = arith.constant 0.000000e+00 : f32
    %20 = vector.broadcast %cst_13 : f32 to vector<128x128xf32>
    %21 = arith.cmpf ogt, %19, %20 : vector<128x128xf32>
    %cst_14 = arith.constant 0.00999999977 : f32
    %22 = vector.broadcast %cst_14 : f32 to vector<128x128xf32>
    %23 = arith.mulf %22, %19 : vector<128x128xf32>
    %24 = arith.select %21, %19, %23 : vector<128x128xi1>, vector<128x128xf32>
    %25 = math.tanh %24 : vector<128x128xf32>
    %26 = vector.broadcast %4 : vector<1x128xf32> to vector<128x128xf32>
    %27 = arith.mulf %25, %26 : vector<128x128xf32>
    %28 = vector.shape_cast %27 : vector<128x128xf32> to vector<1x128x128xf32>
    %cst_15 = arith.constant dense<0.000000e+00> : vector<1x128xf32>
    %29 = vector.multi_reduction <add>, %28, %cst_15 [2] : vector<1x128x128xf32> to vector<1x128xf32>
    %30 = arith.addf %29, %5 : vector<1x128xf32>
    %31 = arith.negf %30 : vector<1x128xf32>
    %32 = math.exp %31 : vector<1x128xf32>
    %cst_16 = arith.constant 1.000000e+00 : f32
    %33 = vector.broadcast %cst_16 : f32 to vector<1x128xf32>
    %34 = arith.addf %33, %32 : vector<1x128xf32>
    %35 = arith.divf %33, %34 : vector<1x128xf32>
    %c0_17 = arith.constant 0 : index
    %c0_18 = arith.constant 0 : index
    %36 = vector.load %arg5[%c0_17, %c0_18] : memref<1x128xf32, #tpu.memory_space<vmem>>, vector<1x128xf32>
    tpu.vector_store %arg5[%c0_17, %c0_18], %35 {strides = array<i32>} : memref<1x128xf32, #tpu.memory_space<vmem>>, vector<1x128xf32>,
    return
  }
  func.func @transform_0(%arg0: i32) -> (i32, i32) {
    %c0_i32 = arith.constant 0 : i32
    %c0_i32_0 = arith.constant 0 : i32
    return %arg0, %c0_i32 : i32, i32
  }
  func.func @transform_1(%arg0: i32) -> (i32, i32) {
    %c0_i32 = arith.constant 0 : i32
    %c0_i32_0 = arith.constant 0 : i32
    %c0_i32_1 = arith.constant 0 : i32
    return %c0_i32, %c0_i32_0 : i32, i32
  }
  func.func @transform_2(%arg0: i32) -> (i32, i32) {
    %c0_i32 = arith.constant 0 : i32
    %c0_i32_0 = arith.constant 0 : i32
    %c0_i32_1 = arith.constant 0 : i32
    return %c0_i32, %c0_i32_0 : i32, i32
  }
  func.func @transform_3(%arg0: i32) -> (i32, i32) {
    %c0_i32 = arith.constant 0 : i32
    %c0_i32_0 = arith.constant 0 : i32
    %c0_i32_1 = arith.constant 0 : i32
    return %c0_i32, %c0_i32_0 : i32, i32
  }
  func.func @transform_4(%arg0: i32) -> (i32, i32) {
    %c0_i32 = arith.constant 0 : i32
    %c0_i32_0 = arith.constant 0 : i32
    return %arg0, %c0_i32 : i32, i32
  }
}

</mosaic_0001>

<llo_original>
// kernel: tpu_custom_call.1
$region0: #{tpu_custom_call.1}
  #allocation0 [shape = 'u32[]', space=smem, size = 0x4, offset = 0x4, fixed_abs, tag = 'smem constant byte address 0x4 - core index']
  #allocation1 [shape = 'u32[144,128]{1,0:T(1,128)}', space=vmem, size = 0x12000, scoped, tag = 'internal scratch']
  %s0 = inlined_call_operand.hbm [shape: f32[8,128], index: 0, kind: input, shape index: {}]
  %s1 = inlined_call_operand.hbm [shape: bf16[128,128], index: 1, kind: input, shape index: {}]
  %s2 = inlined_call_operand.hbm [shape: bf16[128,128], index: 2, kind: input, shape index: {}]
  %s3 = inlined_call_operand.vmem [shape: f32[4,128], index: 3, kind: input, shape index: {}]
  %s4 = inlined_call_operand.hbm [shape: f32[1,128], index: 4, kind: output, shape index: {}]
  %s5 = sld [smem:[#allocation0]]
  $region38: #{tpu_custom_call.1} parent=0
    _
  %s7 = ssub.s32 1, %s5
  %s8 = scalar_select 0, %s7, %s5
  $region1: #{tpu_custom_call.1} parent=0
    #allocation2 [shape = 'u8[65536]{0}', space=vmem, size = 0x10000, scoped, tag = 'input window, operand 0, single buffered']
    #allocation3 [shape = 's32[1]{0}', space=sflag, size = 0x4, scoped, tag = 'scoped memory for tpu_custom_call.1']
    #allocation4 [shape = 's32[1]{0}', space=sflag, size = 0x4, scoped, tag = 'scoped memory for tpu_custom_call.1']
    #allocation5 [shape = 'u8[32768]{0}', space=vmem, size = 0x8000, scoped, tag = 'input window, operand 1, single buffered']
    #allocation6 [shape = 's32[1]{0}', space=sflag, size = 0x4, scoped, tag = 'scoped memory for tpu_custom_call.1']
    #allocation7 [shape = 'u8[32768]{0}', space=vmem, size = 0x8000, scoped, tag = 'input window, operand 2, single buffered']
    #allocation8 [shape = 'u8[512]{0}', space=vmem, size = 0x400, scoped, tag = 'output window, operand 0, single buffered']
    %9 = vsyncpa [#allocation3], 0
    %10 = vsyncpa [#allocation6], 0
    %11 = vsyncpa [#allocation4], 0
    // Predicated region
    $region2: #{tpu_custom_call.1} parent=1 // pred_check
      _
    $region3: #{tpu_custom_call.1} parent=1 // pred_check_branch
      %13 = sbr.rel (0) target = $region5
    $region4: #{tpu_custom_call.1} parent=1 // pred_region
      %s15 = ssub.s32 2048, 128
      %16 = vsyncadd [#allocation3], %s15
      %s17 = sshll.u32 [#allocation2], 4
      %s18 = int_to_ptr.vmem [resolvable:$true] %s17
      %23 = dma.hbm_to_vmem [thread:$0]  %s0, 128, %s18, [#allocation3], 128, 128, 8
    $region5: #{tpu_custom_call.1} parent=1 // pred_fallthru
      _
    // Predicated region
    $region6: #{tpu_custom_call.1} parent=1 // pred_check
      _
    $region7: #{tpu_custom_call.1} parent=1 // pred_check_branch
      %25 = sbr.rel (0) target = $region9
    $region8: #{tpu_custom_call.1} parent=1 // pred_region
      %s27 = ssub.s32 1024, 1024
      %28 = vsyncadd [#allocation6], %s27
      %s29 = sshll.u32 [#allocation5], 4
      %s30 = int_to_ptr.vmem [resolvable:$true] %s29
      %35 = dma.hbm_to_vmem [thread:$0]  %s1, 1024, %s30, [#allocation6], 64, 64, 4
    $region9: #{tpu_custom_call.1} parent=1 // pred_fallthru
      _
    // Predicated region
    $region10: #{tpu_custom_call.1} parent=1 // pred_check
      _
    $region11: #{tpu_custom_call.1} parent=1 // pred_check_branch
      %37 = sbr.rel (0) target = $region13
    $region12: #{tpu_custom_call.1} parent=1 // pred_region
      %s39 = ssub.s32 1024, 1024
      %40 = vsyncadd [#allocation6], %s39
      %s41 = sshll.u32 [#allocation7], 4
      %s42 = int_to_ptr.vmem [resolvable:$true] %s41
      %47 = dma.hbm_to_vmem [thread:$0]  %s2, 1024, %s42, [#allocation6], 64, 64, 4
    $region13: #{tpu_custom_call.1} parent=1 // pred_fallthru
      _
    // Predicated region
    $region14: #{tpu_custom_call.1} parent=1 // pred_check
      _
    $region15: #{tpu_custom_call.1} parent=1 // pred_check_branch
      %49 = sbr.rel (0) target = $region17
    $region16: #{tpu_custom_call.1} parent=1 // pred_region
      _
    $region17: #{tpu_custom_call.1} parent=1 // pred_fallthru
      _
    // Predicated region
    $region18: #{tpu_custom_call.1} parent=1 // pred_check
      _
    $region19: #{tpu_custom_call.1} parent=1 // pred_check_branch
      %51 = sbr.rel (0) target = $region21
    $region20: #{tpu_custom_call.1} parent=1 // pred_region
      %52 = dma.done [#allocation3], 2048
    $region21: #{tpu_custom_call.1} parent=1 // pred_fallthru
      _
    // Predicated region
    $region22: #{tpu_custom_call.1} parent=1 // pred_check
      _
    $region23: #{tpu_custom_call.1} parent=1 // pred_check_branch
      %54 = sbr.rel (0) target = $region25
    $region24: #{tpu_custom_call.1} parent=1 // pred_region
      %55 = dma.done [#allocation6], 1024
    $region25: #{tpu_custom_call.1} parent=1 // pred_fallthru
      _
    // Predicated region
    $region26: #{tpu_custom_call.1} parent=1 // pred_check
      _
    $region27: #{tpu_custom_call.1} parent=1 // pred_check_branch
      %57 = sbr.rel (0) target = $region29
    $region28: #{tpu_custom_call.1} parent=1 // pred_region
      %58 = dma.done [#allocation6], 1024
    $region29: #{tpu_custom_call.1} parent=1 // pred_fallthru
      _
    %v60 = vld [vmem:[#allocation2] sm:$0xff]
    %v61 = vld [vmem:[#allocation2 + $0x8] sm:$0xff]
    %v62 = vld [vmem:[#allocation2 + $0x10] sm:$0xff]
    %v63 = vld [vmem:[#allocation2 + $0x18] sm:$0xff]
    %v64 = vld [vmem:[#allocation2 + $0x20] sm:$0xff]
    %v65 = vld [vmem:[#allocation2 + $0x28] sm:$0xff]
    %v66 = vld [vmem:[#allocation2 + $0x30] sm:$0xff]
    %v67 = vld [vmem:[#allocation2 + $0x38] sm:$0xff]
    %v68 = vld [vmem:[#allocation2 + $0x40] sm:$0xff]
    %v69 = vld [vmem:[#allocation2 + $0x48] sm:$0xff]
    %v70 = vld [vmem:[#allocation2 + $0x50] sm:$0xff]
    %v71 = vld [vmem:[#allocation2 + $0x58] sm:$0xff]
    %v72 = vld [vmem:[#allocation2 + $0x60] sm:$0xff]
    %v73 = vld [vmem:[#allocation2 + $0x68] sm:$0xff]
    %v74 = vld [vmem:[#allocation2 + $0x70] sm:$0xff]
    %v75 = vld [vmem:[#allocation2 + $0x78] sm:$0xff]
    %v76 = vpack.c.bf16 %v61, %v60
    %v77 = vpack.c.bf16 %v63, %v62
    %v78 = vpack.c.bf16 %v65, %v64
    %v79 = vpack.c.bf16 %v67, %v66
    %v80 = vpack.c.bf16 %v69, %v68
    %v81 = vpack.c.bf16 %v71, %v70
    %v82 = vpack.c.bf16 %v73, %v72
    %v83 = vpack.c.bf16 %v75, %v74
    %v84 = vld [vmem:[%s3] sm:$0x1]
    %v85 = vld [vmem:[%s3 + $0x1] sm:$0x1]
    %v86 = vld [vmem:[%s3 + $0x2] sm:$0x1]
    %v87 = vld [vmem:[%s3 + $0x3] sm:$0x1]
    %v88 = vld [vmem:[#allocation5] sm:$0xf]
    %v89 = vld [vmem:[#allocation5 + $0x4] sm:$0xf]
    %v90 = vld [vmem:[#allocation5 + $0x8] sm:$0xf]
    %v91 = vld [vmem:[#allocation5 + $0xc] sm:$0xf]
    %v92 = vld [vmem:[#allocation5 + $0x10] sm:$0xf]
    %v93 = vld [vmem:[#allocation5 + $0x14] sm:$0xf]
    %v94 = vld [vmem:[#allocation5 + $0x18] sm:$0xf]
    %v95 = vld [vmem:[#allocation5 + $0x1c] sm:$0xf]
    %v96 = vld [vmem:[#allocation5 + $0x20] sm:$0xf]
    %v97 = vld [vmem:[#allocation5 + $0x24] sm:$0xf]
    %v98 = vld [vmem:[#allocation5 + $0x28] sm:$0xf]
    %v99 = vld [vmem:[#allocation5 + $0x2c] sm:$0xf]
    %v100 = vld [vmem:[#allocation5 + $0x30] sm:$0xf]
    %v101 = vld [vmem:[#allocation5 + $0x34] sm:$0xf]
    %v102 = vld [vmem:[#allocation5 + $0x38] sm:$0xf]
    %v103 = vld [vmem:[#allocation5 + $0x3c] sm:$0xf]
    %v104 = vlaneseq
    %v105 = vshrl.u32 %v104, 7
    %v106 = vsub.s32 0, %v105
    %v107 = vrot.slane %v84, %v106
    %v124 = vunpack.c.l.b16 %v88
    %v125 = vunpack.c.l.b16 %v89
    %v126 = vunpack.c.l.b16 %v90
    %v127 = vunpack.c.l.b16 %v91
    %v128 = vunpack.c.l.b16 %v92
    %v129 = vunpack.c.l.b16 %v93
    %v130 = vunpack.c.l.b16 %v94
    %v131 = vunpack.c.l.b16 %v95
    %v132 = vunpack.c.l.b16 %v96
    %v133 = vunpack.c.l.b16 %v97
    %v134 = vunpack.c.l.b16 %v98
    %v135 = vunpack.c.l.b16 %v99
    %v136 = vunpack.c.l.b16 %v100
    %v137 = vunpack.c.l.b16 %v101
    %v138 = vunpack.c.l.b16 %v102
    %v139 = vunpack.c.l.b16 %v103
    %v140 = vpack.c.b16 %v125, %v124
    %v141 = vpack.c.b16 %v127, %v126
    %v142 = vpack.c.b16 %v129, %v128
    %v143 = vpack.c.b16 %v131, %v130
    %v144 = vpack.c.b16 %v133, %v132
    %v145 = vpack.c.b16 %v135, %v134
    %v146 = vpack.c.b16 %v137, %v136
    %v147 = vpack.c.b16 %v139, %v138
    %156 = vmatprep.subr.bf16.mxu0 0
    %157 = vmatpush1.bf16.msra.mxu0 %v140
    %158 = vmatprep.subr.bf16.mxu0 0
    %159 = vmatpush1.bf16.msra.mxu0 %v141
    %160 = vmatprep.subr.bf16.mxu0 0
    %161 = vmatpush1.bf16.msra.mxu0 %v142
    %162 = vmatprep.subr.bf16.mxu0 0
    %163 = vmatpush1.bf16.msra.mxu0 %v143
    %164 = vmatprep.subr.bf16.mxu0 0
    %165 = vmatpush1.bf16.msra.mxu0 %v144
    %166 = vmatprep.subr.bf16.mxu0 0
    %167 = vmatpush1.bf16.msra.mxu0 %v145
    %168 = vmatprep.subr.bf16.mxu0 0
    %169 = vmatpush1.bf16.msra.mxu0 %v146
    %170 = vmatprep.subr.bf16.mxu0 0
    %171 = vmatpush1.bf16.msra.mxu0 %v147
    %172 = vmatprep.subr.bf16.mxu0 0
    %173 = vmatpush1.bf16.msra.mxu0 0
    %174 = vmatprep.subr.bf16.mxu0 0
    %175 = vmatpush1.bf16.msra.mxu0 0
    %176 = vmatprep.subr.bf16.mxu0 0
    %177 = vmatpush1.bf16.msra.mxu0 0
    %178 = vmatprep.subr.bf16.mxu0 0
    %179 = vmatpush1.bf16.msra.mxu0 0
    %180 = vmatprep.subr.bf16.mxu0 0
    %181 = vmatpush1.bf16.msra.mxu0 0
    %182 = vmatprep.subr.bf16.mxu0 0
    %183 = vmatpush1.bf16.msra.mxu0 0
    %184 = vmatprep.subr.bf16.mxu0 0
    %185 = vmatpush1.bf16.msra.mxu0 0
    %186 = vmatprep.subr.bf16.mxu0 0
    %187 = vmatpush1.bf16.msra.mxu0 0
    %188 = vmatprep.mubr.bf16.mxu0 0
    %189 = vmatmul.mubr.bf16.gmra.mrb[0].mxu0 %v76
    %v190 = vpop.f32.mrb[0].mxu0
    %v191 = vadd.f32 %v107, %v190
    %v192 = vpop.f32.mrb[0].mxu0
    %v193 = vpop.f32.mrb[0].mxu0
    %v194 = vadd.f32 %v107, %v193
    %v195 = vpop.f32.mrb[0].mxu0
    %196 = vmatprep.mubr.bf16.mxu0 0
    %197 = vmatmul.mubr.bf16.gmra.mrb[0].mxu0 %v77
    %v198 = vpop.f32.mrb[0].mxu0
    %v199 = vadd.f32 %v107, %v198
    %v200 = vpop.f32.mrb[0].mxu0
    %v201 = vpop.f32.mrb[0].mxu0
    %v202 = vadd.f32 %v107, %v201
    %v203 = vpop.f32.mrb[0].mxu0
    %204 = vmatprep.mubr.bf16.mxu0 0
    %205 = vmatmul.mubr.bf16.gmra.mrb[0].mxu0 %v78
    %v206 = vpop.f32.mrb[0].mxu0
    %v207 = vadd.f32 %v107, %v206
    %v208 = vpop.f32.mrb[0].mxu0
    %v209 = vpop.f32.mrb[0].mxu0
    %v210 = vadd.f32 %v107, %v209
    %v211 = vpop.f32.mrb[0].mxu0
    %212 = vmatprep.mubr.bf16.mxu0 0
    %213 = vmatmul.mubr.bf16.gmra.mrb[0].mxu0 %v79
    %v214 = vpop.f32.mrb[0].mxu0
    %v215 = vadd.f32 %v107, %v214
    %v216 = vpop.f32.mrb[0].mxu0
    %v217 = vpop.f32.mrb[0].mxu0
    %v218 = vadd.f32 %v107, %v217
    %v219 = vpop.f32.mrb[0].mxu0
    %220 = vmatprep.mubr.bf16.mxu0 0
    %221 = vmatmul.mubr.bf16.gmra.mrb[0].mxu0 %v80
    %v222 = vpop.f32.mrb[0].mxu0
    %v223 = vadd.f32 %v107, %v222
    %v224 = vpop.f32.mrb[0].mxu0
    %v225 = vpop.f32.mrb[0].mxu0
    %v226 = vadd.f32 %v107, %v225
    %v227 = vpop.f32.mrb[0].mxu0
    %228 = vmatprep.mubr.bf16.mxu0 0
    %229 = vmatmul.mubr.bf16.gmra.mrb[0].mxu0 %v81
    %v230 = vpop.f32.mrb[0].mxu0
    %v231 = vadd.f32 %v107, %v230
    %v232 = vpop.f32.mrb[0].mxu0
    %v233 = vpop.f32.mrb[0].mxu0
    %v234 = vadd.f32 %v107, %v233
    %v235 = vpop.f32.mrb[0].mxu0
    %236 = vmatprep.mubr.bf16.mxu0 0
    %237 = vmatmul.mubr.bf16.gmra.mrb[0].mxu0 %v82
    %v238 = vpop.f32.mrb[0].mxu0
    %v239 = vadd.f32 %v107, %v238
    %v240 = vpop.f32.mrb[0].mxu0
    %v241 = vpop.f32.mrb[0].mxu0
    %v242 = vadd.f32 %v107, %v241
    %v243 = vpop.f32.mrb[0].mxu0
    %244 = vmatprep.mubr.bf16.mxu0 0
    %245 = vmatmul.mubr.bf16.gmra.mrb[0].mxu0 %v83
    %v246 = vpop.f32.mrb[0].mxu0
    %v247 = vadd.f32 %v107, %v246
    %v248 = vpop.f32.mrb[0].mxu0
    %v249 = vpop.f32.mrb[0].mxu0
    %v250 = vadd.f32 %v107, %v249
    %v251 = vpop.f32.mrb[0].mxu0
    %252 = vdwg.mxu0
    %vm253 = vcmp.gt.f32.partialorder %v191, 0.0
    %vm254 = vcmp.gt.f32.partialorder %v194, 0.0
    %vm255 = vcmp.gt.f32.partialorder %v199, 0.0
    %vm256 = vcmp.gt.f32.partialorder %v202, 0.0
    %vm257 = vcmp.gt.f32.partialorder %v207, 0.0
    %vm258 = vcmp.gt.f32.partialorder %v210, 0.0
    %vm259 = vcmp.gt.f32.partialorder %v215, 0.0
    %vm260 = vcmp.gt.f32.partialorder %v218, 0.0
    %vm261 = vcmp.gt.f32.partialorder %v223, 0.0
    %vm262 = vcmp.gt.f32.partialorder %v226, 0.0
    %vm263 = vcmp.gt.f32.partialorder %v231, 0.0
    %vm264 = vcmp.gt.f32.partialorder %v234, 0.0
    %vm265 = vcmp.gt.f32.partialorder %v239, 0.0
    %vm266 = vcmp.gt.f32.partialorder %v242, 0.0
    %vm267 = vcmp.gt.f32.partialorder %v247, 0.0
    %vm268 = vcmp.gt.f32.partialorder %v250, 0.0
    %v269 = vmul.f32 %v191, 0.01
    %v270 = vmul.f32 %v194, 0.01
    %v271 = vmul.f32 %v199, 0.01
    %v272 = vmul.f32 %v202, 0.01
    %v273 = vmul.f32 %v207, 0.01
    %v274 = vmul.f32 %v210, 0.01
    %v275 = vmul.f32 %v215, 0.01
    %v276 = vmul.f32 %v218, 0.01
    %v277 = vmul.f32 %v223, 0.01
    %v278 = vmul.f32 %v226, 0.01
    %v279 = vmul.f32 %v231, 0.01
    %v280 = vmul.f32 %v234, 0.01
    %v281 = vmul.f32 %v239, 0.01
    %v282 = vmul.f32 %v242, 0.01
    %v283 = vmul.f32 %v247, 0.01
    %v284 = vmul.f32 %v250, 0.01
    %v285 = vsel %vm253, %v191, %v269
    %v286 = vsel %vm254, %v194, %v270
    %v287 = vsel %vm255, %v199, %v271
    %v288 = vsel %vm256, %v202, %v272
    %v289 = vsel %vm257, %v207, %v273
    %v290 = vsel %vm258, %v210, %v274
    %v291 = vsel %vm259, %v215, %v275
    %v292 = vsel %vm260, %v218, %v276
    %v293 = vsel %vm261, %v223, %v277
    %v294 = vsel %vm262, %v226, %v278
    %v295 = vsel %vm263, %v231, %v279
    %v296 = vsel %vm264, %v234, %v280
    %v297 = vsel %vm265, %v239, %v281
    %v298 = vsel %vm266, %v242, %v282
    %v299 = vsel %vm267, %v247, %v283
    %v300 = vsel %vm268, %v250, %v284
    %v301 = vpack.c.bf16 %v286, %v285
    %v302 = vpack.c.bf16 %v288, %v287
    %v303 = vpack.c.bf16 %v290, %v289
    %v304 = vpack.c.bf16 %v292, %v291
    %v305 = vpack.c.bf16 %v294, %v293
    %v306 = vpack.c.bf16 %v296, %v295
    %v307 = vpack.c.bf16 %v298, %v297
    %v308 = vpack.c.bf16 %v300, %v299
    %v309 = vld [vmem:[#allocation7] sm:$0xf]
    %v310 = vld [vmem:[#allocation7 + $0x4] sm:$0xf]
    %v311 = vld [vmem:[#allocation7 + $0x8] sm:$0xf]
    %v312 = vld [vmem:[#allocation7 + $0xc] sm:$0xf]
    %v313 = vld [vmem:[#allocation7 + $0x10] sm:$0xf]
    %v314 = vld [vmem:[#allocation7 + $0x14] sm:$0xf]
    %v315 = vld [vmem:[#allocation7 + $0x18] sm:$0xf]
    %v316 = vld [vmem:[#allocation7 + $0x1c] sm:$0xf]
    %v317 = vld [vmem:[#allocation7 + $0x20] sm:$0xf]
    %v318 = vld [vmem:[#allocation7 + $0x24] sm:$0xf]
    %v319 = vld [vmem:[#allocation7 + $0x28] sm:$0xf]
    %v320 = vld [vmem:[#allocation7 + $0x2c] sm:$0xf]
    %v321 = vld [vmem:[#allocation7 + $0x30] sm:$0xf]
    %v322 = vld [vmem:[#allocation7 + $0x34] sm:$0xf]
    %v323 = vld [vmem:[#allocation7 + $0x38] sm:$0xf]
    %v324 = vld [vmem:[#allocation7 + $0x3c] sm:$0xf]
    %v325 = vlaneseq
    %v326 = vshrl.u32 %v325, 7
    %v327 = vsub.s32 0, %v326
    %v328 = vrot.slane %v85, %v327
    %v345 = vunpack.c.l.b16 %v309
    %v346 = vunpack.c.l.b16 %v310
    %v347 = vunpack.c.l.b16 %v311
    %v348 = vunpack.c.l.b16 %v312
    %v349 = vunpack.c.l.b16 %v313
    %v350 = vunpack.c.l.b16 %v314
    %v351 = vunpack.c.l.b16 %v315
    %v352 = vunpack.c.l.b16 %v316
    %v353 = vunpack.c.l.b16 %v317
    %v354 = vunpack.c.l.b16 %v318
    %v355 = vunpack.c.l.b16 %v319
    %v356 = vunpack.c.l.b16 %v320
    %v357 = vunpack.c.l.b16 %v321
    %v358 = vunpack.c.l.b16 %v322
    %v359 = vunpack.c.l.b16 %v323
    %v360 = vunpack.c.l.b16 %v324
    %v361 = vpack.c.b16 %v346, %v345
    %v362 = vpack.c.b16 %v348, %v347
    %v363 = vpack.c.b16 %v350, %v349
    %v364 = vpack.c.b16 %v352, %v351
    %v365 = vpack.c.b16 %v354, %v353
    %v366 = vpack.c.b16 %v356, %v355
    %v367 = vpack.c.b16 %v358, %v357
    %v368 = vpack.c.b16 %v360, %v359
    %377 = vmatprep.subr.bf16.mxu0 0
    %378 = vmatpush1.bf16.msra.mxu0 %v361
    %379 = vmatprep.subr.bf16.mxu0 0
    %380 = vmatpush1.bf16.msra.mxu0 %v362
    %381 = vmatprep.subr.bf16.mxu0 0
    %382 = vmatpush1.bf16.msra.mxu0 %v363
    %383 = vmatprep.subr.bf16.mxu0 0
    %384 = vmatpush1.bf16.msra.mxu0 %v364
    %385 = vmatprep.subr.bf16.mxu0 0
    %386 = vmatpush1.bf16.msra.mxu0 %v365
    %387 = vmatprep.subr.bf16.mxu0 0
    %388 = vmatpush1.bf16.msra.mxu0 %v366
    %389 = vmatprep.subr.bf16.mxu0 0
    %390 = vmatpush1.bf16.msra.mxu0 %v367
    %391 = vmatprep.subr.bf16.mxu0 0
    %392 = vmatpush1.bf16.msra.mxu0 %v368
    %393 = vmatprep.subr.bf16.mxu0 0
    %394 = vmatpush1.bf16.msra.mxu0 0
    %395 = vmatprep.subr.bf16.mxu0 0
    %396 = vmatpush1.bf16.msra.mxu0 0
    %397 = vmatprep.subr.bf16.mxu0 0
    %398 = vmatpush1.bf16.msra.mxu0 0
    %399 = vmatprep.subr.bf16.mxu0 0
    %400 = vmatpush1.bf16.msra.mxu0 0
    %401 = vmatprep.subr.bf16.mxu0 0
    %402 = vmatpush1.bf16.msra.mxu0 0
    %403 = vmatprep.subr.bf16.mxu0 0
    %404 = vmatpush1.bf16.msra.mxu0 0
    %405 = vmatprep.subr.bf16.mxu0 0
    %406 = vmatpush1.bf16.msra.mxu0 0
    %407 = vmatprep.subr.bf16.mxu0 0
    %408 = vmatpush1.bf16.msra.mxu0 0
    %409 = vmatprep.mubr.bf16.mxu0 0
    %410 = vmatmul.mubr.bf16.gmra.mrb[0].mxu0 %v301
    %v411 = vpop.f32.mrb[0].mxu0
    %v412 = vadd.f32 %v328, %v411
    %v413 = vpop.f32.mrb[0].mxu0
    %v414 = vpop.f32.mrb[0].mxu0
    %v415 = vadd.f32 %v328, %v414
    %v416 = vpop.f32.mrb[0].mxu0
    %417 = vmatprep.mubr.bf16.mxu0 0
    %418 = vmatmul.mubr.bf16.gmra.mrb[0].mxu0 %v302
    %v419 = vpop.f32.mrb[0].mxu0
    %v420 = vadd.f32 %v328, %v419
    %v421 = vpop.f32.mrb[0].mxu0
    %v422 = vpop.f32.mrb[0].mxu0
    %v423 = vadd.f32 %v328, %v422
    %v424 = vpop.f32.mrb[0].mxu0
    %425 = vmatprep.mubr.bf16.mxu0 0
    %426 = vmatmul.mubr.bf16.gmra.mrb[0].mxu0 %v303
    %v427 = vpop.f32.mrb[0].mxu0
    %v428 = vadd.f32 %v328, %v427
    %v429 = vpop.f32.mrb[0].mxu0
    %v430 = vpop.f32.mrb[0].mxu0
    %v431 = vadd.f32 %v328, %v430
    %v432 = vpop.f32.mrb[0].mxu0
    %433 = vmatprep.mubr.bf16.mxu0 0
    %434 = vmatmul.mubr.bf16.gmra.mrb[0].mxu0 %v304
    %v435 = vpop.f32.mrb[0].mxu0
    %v436 = vadd.f32 %v328, %v435
    %v437 = vpop.f32.mrb[0].mxu0
    %v438 = vpop.f32.mrb[0].mxu0
    %v439 = vadd.f32 %v328, %v438
    %v440 = vpop.f32.mrb[0].mxu0
    %441 = vmatprep.mubr.bf16.mxu0 0
    %442 = vmatmul.mubr.bf16.gmra.mrb[0].mxu0 %v305
    %v443 = vpop.f32.mrb[0].mxu0
    %v444 = vadd.f32 %v328, %v443
    %v445 = vpop.f32.mrb[0].mxu0
    %v446 = vpop.f32.mrb[0].mxu0
    %v447 = vadd.f32 %v328, %v446
    %v448 = vpop.f32.mrb[0].mxu0
    %449 = vmatprep.mubr.bf16.mxu0 0
    %450 = vmatmul.mubr.bf16.gmra.mrb[0].mxu0 %v306
    %v451 = vpop.f32.mrb[0].mxu0
    %v452 = vadd.f32 %v328, %v451
    %v453 = vpop.f32.mrb[0].mxu0
    %v454 = vpop.f32.mrb[0].mxu0
    %v455 = vadd.f32 %v328, %v454
    %v456 = vpop.f32.mrb[0].mxu0
    %457 = vmatprep.mubr.bf16.mxu0 0
    %458 = vmatmul.mubr.bf16.gmra.mrb[0].mxu0 %v307
    %v459 = vpop.f32.mrb[0].mxu0
    %v460 = vadd.f32 %v328, %v459
    %v461 = vpop.f32.mrb[0].mxu0
    %v462 = vpop.f32.mrb[0].mxu0
    %v463 = vadd.f32 %v328, %v462
    %v464 = vpop.f32.mrb[0].mxu0
    %465 = vmatprep.mubr.bf16.mxu0 0
    %466 = vmatmul.mubr.bf16.gmra.mrb[0].mxu0 %v308
    %v467 = vpop.f32.mrb[0].mxu0
    %v468 = vadd.f32 %v328, %v467
    %v469 = vpop.f32.mrb[0].mxu0
    %v470 = vpop.f32.mrb[0].mxu0
    %v471 = vadd.f32 %v328, %v470
    %v472 = vpop.f32.mrb[0].mxu0
    %473 = vdwg.mxu0
    %vm474 = vcmp.gt.f32.partialorder %v412, 0.0
    %vm475 = vcmp.gt.f32.partialorder %v415, 0.0
    %vm476 = vcmp.gt.f32.partialorder %v420, 0.0
    %vm477 = vcmp.gt.f32.partialorder %v423, 0.0
    %vm478 = vcmp.gt.f32.partialorder %v428, 0.0
    %vm479 = vcmp.gt.f32.partialorder %v431, 0.0
    %vm480 = vcmp.gt.f32.partialorder %v436, 0.0
    %vm481 = vcmp.gt.f32.partialorder %v439, 0.0
    %vm482 = vcmp.gt.f32.partialorder %v444, 0.0
    %vm483 = vcmp.gt.f32.partialorder %v447, 0.0
    %vm484 = vcmp.gt.f32.partialorder %v452, 0.0
    %vm485 = vcmp.gt.f32.partialorder %v455, 0.0
    %vm486 = vcmp.gt.f32.partialorder %v460, 0.0
    %vm487 = vcmp.gt.f32.partialorder %v463, 0.0
    %vm488 = vcmp.gt.f32.partialorder %v468, 0.0
    %vm489 = vcmp.gt.f32.partialorder %v471, 0.0
    %v490 = vmul.f32 %v412, 0.01
    %v491 = vmul.f32 %v415, 0.01
    %v492 = vmul.f32 %v420, 0.01
    %v493 = vmul.f32 %v423, 0.01
    %v494 = vmul.f32 %v428, 0.01
    %v495 = vmul.f32 %v431, 0.01
    %v496 = vmul.f32 %v436, 0.01
    %v497 = vmul.f32 %v439, 0.01
    %v498 = vmul.f32 %v444, 0.01
    %v499 = vmul.f32 %v447, 0.01
    %v500 = vmul.f32 %v452, 0.01
    %v501 = vmul.f32 %v455, 0.01
    %v502 = vmul.f32 %v460, 0.01
    %v503 = vmul.f32 %v463, 0.01
    %v504 = vmul.f32 %v468, 0.01
    %v505 = vmul.f32 %v471, 0.01
    %v506 = vsel %vm474, %v412, %v490
    %v507 = vsel %vm475, %v415, %v491
    %v508 = vsel %vm476, %v420, %v492
    %v509 = vsel %vm477, %v423, %v493
    %v510 = vsel %vm478, %v428, %v494
    %v511 = vsel %vm479, %v431, %v495
    %v512 = vsel %vm480, %v436, %v496
    %v513 = vsel %vm481, %v439, %v497
    %v514 = vsel %vm482, %v444, %v498
    %v515 = vsel %vm483, %v447, %v499
    %v516 = vsel %vm484, %v452, %v500
    %v517 = vsel %vm485, %v455, %v501
    %v518 = vsel %vm486, %v460, %v502
    %v519 = vsel %vm487, %v463, %v503
    %v520 = vsel %vm488, %v468, %v504
    %v521 = vsel %vm489, %v471, %v505
    %v522 = vtanh.pop %v506
    %v523 = vtanh.pop %v507
    %v524 = vtanh.pop %v508
    %v525 = vtanh.pop %v509
    %v526 = vtanh.pop %v510
    %v527 = vtanh.pop %v511
    %v528 = vtanh.pop %v512
    %v529 = vtanh.pop %v513
    %v530 = vtanh.pop %v514
    %v531 = vtanh.pop %v515
    %v532 = vtanh.pop %v516
    %v533 = vtanh.pop %v517
    %v534 = vtanh.pop %v518
    %v535 = vtanh.pop %v519
    %v536 = vtanh.pop %v520
    %v537 = vtanh.pop %v521
    %v538 = vlaneseq
    %v539 = vshrl.u32 %v538, 7
    %v540 = vsub.s32 0, %v539
    %v541 = vrot.slane %v86, %v540
    %v542 = vmul.f32 %v522, %v541
    %v543 = vmul.f32 %v523, %v541
    %v544 = vmul.f32 %v524, %v541
    %v545 = vmul.f32 %v525, %v541
    %v546 = vmul.f32 %v526, %v541
    %v547 = vmul.f32 %v527, %v541
    %v548 = vmul.f32 %v528, %v541
    %v549 = vmul.f32 %v529, %v541
    %v550 = vmul.f32 %v530, %v541
    %v551 = vmul.f32 %v531, %v541
    %v552 = vmul.f32 %v532, %v541
    %v553 = vmul.f32 %v533, %v541
    %v554 = vmul.f32 %v534, %v541
    %v555 = vmul.f32 %v535, %v541
    %v556 = vmul.f32 %v536, %v541
    %v557 = vmul.f32 %v537, %v541
    %558 = vadd.xlane.f32.xlu0 %v542
    %v559 = vpop.xlane.xlu0 %558
    %560 = vadd.xlane.f32.xlu0 %v543
    %v561 = vpop.xlane.xlu0 %560
    %562 = vadd.xlane.f32.xlu0 %v544
    %v563 = vpop.xlane.xlu0 %562
    %564 = vadd.xlane.f32.xlu0 %v545
    %v565 = vpop.xlane.xlu0 %564
    %566 = vadd.xlane.f32.xlu0 %v546
    %v567 = vpop.xlane.xlu0 %566
    %568 = vadd.xlane.f32.xlu0 %v547
    %v569 = vpop.xlane.xlu0 %568
    %570 = vadd.xlane.f32.xlu0 %v548
    %v571 = vpop.xlane.xlu0 %570
    %572 = vadd.xlane.f32.xlu0 %v549
    %v573 = vpop.xlane.xlu0 %572
    %574 = vadd.xlane.f32.xlu0 %v550
    %v575 = vpop.xlane.xlu0 %574
    %576 = vadd.xlane.f32.xlu0 %v551
    %v577 = vpop.xlane.xlu0 %576
    %578 = vadd.xlane.f32.xlu0 %v552
    %v579 = vpop.xlane.xlu0 %578
    %580 = vadd.xlane.f32.xlu0 %v553
    %v581 = vpop.xlane.xlu0 %580
    %582 = vadd.xlane.f32.xlu0 %v554
    %v583 = vpop.xlane.xlu0 %582
    %584 = vadd.xlane.f32.xlu0 %v555
    %v585 = vpop.xlane.xlu0 %584
    %586 = vadd.xlane.f32.xlu0 %v556
    %v587 = vpop.xlane.xlu0 %586
    %588 = vadd.xlane.f32.xlu0 %v557
    %v589 = vpop.xlane.xlu0 %588
    %v591 = vlaneseq
    %v592 = vshrl.u32 %v591, 7
    %v593 = vsub.s32 0, %v592
    %v594 = vrot.slane %v87, %v593
    %596 = vbcast.lane.b32.xlu0 %v594, 256
    %v597 = vpop.permute.xlu0 %596
    %s599 = sor.u32 256, 8
    %600 = vbcast.lane.b32.xlu0 %v594, %s599
    %v601 = vpop.permute.xlu0 %600
    %s603 = sor.u32 256, 16
    %604 = vbcast.lane.b32.xlu0 %v594, %s603
    %v605 = vpop.permute.xlu0 %604
    %s607 = sor.u32 256, 24
    %608 = vbcast.lane.b32.xlu0 %v594, %s607
    %v609 = vpop.permute.xlu0 %608
    %s611 = sor.u32 256, 32
    %612 = vbcast.lane.b32.xlu0 %v594, %s611
    %v613 = vpop.permute.xlu0 %612
    %s615 = sor.u32 256, 40
    %616 = vbcast.lane.b32.xlu0 %v594, %s615
    %v617 = vpop.permute.xlu0 %616
    %s619 = sor.u32 256, 48
    %620 = vbcast.lane.b32.xlu0 %v594, %s619
    %v621 = vpop.permute.xlu0 %620
    %s623 = sor.u32 256, 56
    %624 = vbcast.lane.b32.xlu0 %v594, %s623
    %v625 = vpop.permute.xlu0 %624
    %s627 = sor.u32 256, 64
    %628 = vbcast.lane.b32.xlu0 %v594, %s627
    %v629 = vpop.permute.xlu0 %628
    %s631 = sor.u32 256, 72
    %632 = vbcast.lane.b32.xlu0 %v594, %s631
    %v633 = vpop.permute.xlu0 %632
    %s635 = sor.u32 256, 80
    %636 = vbcast.lane.b32.xlu0 %v594, %s635
    %v637 = vpop.permute.xlu0 %636
    %s639 = sor.u32 256, 88
    %640 = vbcast.lane.b32.xlu0 %v594, %s639
    %v641 = vpop.permute.xlu0 %640
    %s643 = sor.u32 256, 96
    %644 = vbcast.lane.b32.xlu0 %v594, %s643
    %v645 = vpop.permute.xlu0 %644
    %s647 = sor.u32 256, 104
    %648 = vbcast.lane.b32.xlu0 %v594, %s647
    %v649 = vpop.permute.xlu0 %648
    %s651 = sor.u32 256, 112
    %652 = vbcast.lane.b32.xlu0 %v594, %s651
    %v653 = vpop.permute.xlu0 %652
    %s655 = sor.u32 256, 120
    %656 = vbcast.lane.b32.xlu0 %v594, %s655
    %v657 = vpop.permute.xlu0 %656
    %v674 = vadd.f32 %v559, %v597
    %v675 = vadd.f32 %v561, %v601
    %v676 = vadd.f32 %v563, %v605
    %v677 = vadd.f32 %v565, %v609
    %v678 = vadd.f32 %v567, %v613
    %v679 = vadd.f32 %v569, %v617
    %v680 = vadd.f32 %v571, %v621
    %v681 = vadd.f32 %v573, %v625
    %v682 = vadd.f32 %v575, %v629
    %v683 = vadd.f32 %v577, %v633
    %v684 = vadd.f32 %v579, %v637
    %v685 = vadd.f32 %v581, %v641
    %v686 = vadd.f32 %v583, %v645
    %v687 = vadd.f32 %v585, %v649
    %v688 = vadd.f32 %v587, %v653
    %v689 = vadd.f32 %v589, %v657
    %v690 = vxor.u32 %v674, 2147483648
    %v691 = vxor.u32 %v675, 2147483648
    %v692 = vxor.u32 %v676, 2147483648
    %v693 = vxor.u32 %v677, 2147483648
    %v694 = vxor.u32 %v678, 2147483648
    %v695 = vxor.u32 %v679, 2147483648
    %v696 = vxor.u32 %v680, 2147483648
    %v697 = vxor.u32 %v681, 2147483648
    %v698 = vxor.u32 %v682, 2147483648
    %v699 = vxor.u32 %v683, 2147483648
    %v700 = vxor.u32 %v684, 2147483648
    %v701 = vxor.u32 %v685, 2147483648
    %v702 = vxor.u32 %v686, 2147483648
    %v703 = vxor.u32 %v687, 2147483648
    %v704 = vxor.u32 %v688, 2147483648
    %v705 = vxor.u32 %v689, 2147483648
    %v706 = vmul.f32 %v690, 1.442695
    %v707 = vpow.pop %v706
    %v708 = vmul.f32 %v691, 1.442695
    %v709 = vpow.pop %v708
    %v710 = vmul.f32 %v692, 1.442695
    %v711 = vpow.pop %v710
    %v712 = vmul.f32 %v693, 1.442695
    %v713 = vpow.pop %v712
    %v714 = vmul.f32 %v694, 1.442695
    %v715 = vpow.pop %v714
    %v716 = vmul.f32 %v695, 1.442695
    %v717 = vpow.pop %v716
    %v718 = vmul.f32 %v696, 1.442695
    %v719 = vpow.pop %v718
    %v720 = vmul.f32 %v697, 1.442695
    %v721 = vpow.pop %v720
    %v722 = vmul.f32 %v698, 1.442695
    %v723 = vpow.pop %v722
    %v724 = vmul.f32 %v699, 1.442695
    %v725 = vpow.pop %v724
    %v726 = vmul.f32 %v700, 1.442695
    %v727 = vpow.pop %v726
    %v728 = vmul.f32 %v701, 1.442695
    %v729 = vpow.pop %v728
    %v730 = vmul.f32 %v702, 1.442695
    %v731 = vpow.pop %v730
    %v732 = vmul.f32 %v703, 1.442695
    %v733 = vpow.pop %v732
    %v734 = vmul.f32 %v704, 1.442695
    %v735 = vpow.pop %v734
    %v736 = vmul.f32 %v705, 1.442695
    %v737 = vpow.pop %v736
    %v738 = vadd.f32 %v707, 1.0
    %v739 = vadd.f32 %v709, 1.0
    %v740 = vadd.f32 %v711, 1.0
    %v741 = vadd.f32 %v713, 1.0
    %v742 = vadd.f32 %v715, 1.0
    %v743 = vadd.f32 %v717, 1.0
    %v744 = vadd.f32 %v719, 1.0
    %v745 = vadd.f32 %v721, 1.0
    %v746 = vadd.f32 %v723, 1.0
    %v747 = vadd.f32 %v725, 1.0
    %v748 = vadd.f32 %v727, 1.0
    %v749 = vadd.f32 %v729, 1.0
    %v750 = vadd.f32 %v731, 1.0
    %v751 = vadd.f32 %v733, 1.0
    %v752 = vadd.f32 %v735, 1.0
    %v753 = vadd.f32 %v737, 1.0
    %v754 = vrcp.pop %v738
    %v755 = vmul.f32 1.0, %v754
    %v756 = vrcp.pop %v739
    %v757 = vmul.f32 1.0, %v756
    %v758 = vrcp.pop %v740
    %v759 = vmul.f32 1.0, %v758
    %v760 = vrcp.pop %v741
    %v761 = vmul.f32 1.0, %v760
    %v762 = vrcp.pop %v742
    %v763 = vmul.f32 1.0, %v762
    %v764 = vrcp.pop %v743
    %v765 = vmul.f32 1.0, %v764
    %v766 = vrcp.pop %v744
    %v767 = vmul.f32 1.0, %v766
    %v768 = vrcp.pop %v745
    %v769 = vmul.f32 1.0, %v768
    %v770 = vrcp.pop %v746
    %v771 = vmul.f32 1.0, %v770
    %v772 = vrcp.pop %v747
    %v773 = vmul.f32 1.0, %v772
    %v774 = vrcp.pop %v748
    %v775 = vmul.f32 1.0, %v774
    %v776 = vrcp.pop %v749
    %v777 = vmul.f32 1.0, %v776
    %v778 = vrcp.pop %v750
    %v779 = vmul.f32 1.0, %v778
    %v780 = vrcp.pop %v751
    %v781 = vmul.f32 1.0, %v780
    %v782 = vrcp.pop %v752
    %v783 = vmul.f32 1.0, %v782
    %v784 = vrcp.pop %v753
    %v785 = vmul.f32 1.0, %v784
    %802 = vset.pattern.permute.xlu0 0
    %803 = vperm.xlu0 %802, %v755
    %v804 = vpop.permute.xlu0 %803
    %805 = vset.pattern.permute.xlu0 0
    %806 = vperm.xlu0 %805, %v757
    %v807 = vpop.permute.xlu0 %806
    %808 = vset.pattern.permute.xlu0 0
    %809 = vperm.xlu0 %808, %v759
    %v810 = vpop.permute.xlu0 %809
    %811 = vset.pattern.permute.xlu0 0
    %812 = vperm.xlu0 %811, %v761
    %v813 = vpop.permute.xlu0 %812
    %814 = vset.pattern.permute.xlu0 0
    %815 = vperm.xlu0 %814, %v763
    %v816 = vpop.permute.xlu0 %815
    %817 = vset.pattern.permute.xlu0 0
    %818 = vperm.xlu0 %817, %v765
    %v819 = vpop.permute.xlu0 %818
    %820 = vset.pattern.permute.xlu0 0
    %821 = vperm.xlu0 %820, %v767
    %v822 = vpop.permute.xlu0 %821
    %823 = vset.pattern.permute.xlu0 0
    %824 = vperm.xlu0 %823, %v769
    %v825 = vpop.permute.xlu0 %824
    %826 = vset.pattern.permute.xlu0 0
    %827 = vperm.xlu0 %826, %v771
    %v828 = vpop.permute.xlu0 %827
    %829 = vset.pattern.permute.xlu0 0
    %830 = vperm.xlu0 %829, %v773
    %v831 = vpop.permute.xlu0 %830
    %832 = vset.pattern.permute.xlu0 0
    %833 = vperm.xlu0 %832, %v775
    %v834 = vpop.permute.xlu0 %833
    %835 = vset.pattern.permute.xlu0 0
    %836 = vperm.xlu0 %835, %v777
    %v837 = vpop.permute.xlu0 %836
    %838 = vset.pattern.permute.xlu0 0
    %839 = vperm.xlu0 %838, %v779
    %v840 = vpop.permute.xlu0 %839
    %841 = vset.pattern.permute.xlu0 0
    %842 = vperm.xlu0 %841, %v781
    %v843 = vpop.permute.xlu0 %842
    %844 = vset.pattern.permute.xlu0 0
    %845 = vperm.xlu0 %844, %v783
    %v846 = vpop.permute.xlu0 %845
    %847 = vset.pattern.permute.xlu0 0
    %848 = vperm.xlu0 %847, %v785
    %v849 = vpop.permute.xlu0 %848
    %v850 = vlaneseq
    %v851 = vand.u32 %v850, 127
    %v852 = vlaneseq
    %v853 = vshrl.u32 %v852, 7
    %v854 = vsub.s32 %v851, %v853
    %v855 = vrot.slane %v804, %v854
    %v856 = vadd.s32 %v851, 4294967288
    %v857 = vlaneseq
    %v858 = vshrl.u32 %v857, 7
    %v859 = vsub.s32 %v856, %v858
    %v860 = vrot.slane %v807, %v859
    %vm861 = vcmask 130112
    %v862 = vsel %vm861, %v860, %v855
    %v863 = vadd.s32 %v851, 4294967280
    %v864 = vlaneseq
    %v865 = vshrl.u32 %v864, 7
    %v866 = vsub.s32 %v863, %v865
    %v867 = vrot.slane %v810, %v866
    %vm868 = vcmask 195712
    %v869 = vsel %vm868, %v867, %v862
    %v870 = vadd.s32 %v851, 4294967272
    %v871 = vlaneseq
    %v872 = vshrl.u32 %v871, 7
    %v873 = vsub.s32 %v870, %v872
    %v874 = vrot.slane %v813, %v873
    %vm875 = vcmask 261312
    %v876 = vsel %vm875, %v874, %v869
    %v877 = vadd.s32 %v851, 4294967264
    %v878 = vlaneseq
    %v879 = vshrl.u32 %v878, 7
    %v880 = vsub.s32 %v877, %v879
    %v881 = vrot.slane %v816, %v880
    %vm882 = vcmask 326912
    %v883 = vsel %vm882, %v881, %v876
    %v884 = vadd.s32 %v851, 4294967256
    %v885 = vlaneseq
    %v886 = vshrl.u32 %v885, 7
    %v887 = vsub.s32 %v884, %v886
    %v888 = vrot.slane %v819, %v887
    %vm889 = vcmask 392512
    %v890 = vsel %vm889, %v888, %v883
    %v891 = vadd.s32 %v851, 4294967248
    %v892 = vlaneseq
    %v893 = vshrl.u32 %v892, 7
    %v894 = vsub.s32 %v891, %v893
    %v895 = vrot.slane %v822, %v894
    %vm896 = vcmask 458112
    %v897 = vsel %vm896, %v895, %v890
    %v898 = vadd.s32 %v851, 4294967240
    %v899 = vlaneseq
    %v900 = vshrl.u32 %v899, 7
    %v901 = vsub.s32 %v898, %v900
    %v902 = vrot.slane %v825, %v901
    %vm903 = vcmask 523712
    %v904 = vsel %vm903, %v902, %v897
    %v905 = vadd.s32 %v851, 4294967232
    %v906 = vlaneseq
    %v907 = vshrl.u32 %v906, 7
    %v908 = vsub.s32 %v905, %v907
    %v909 = vrot.slane %v828, %v908
    %vm910 = vcmask 589312
    %v911 = vsel %vm910, %v909, %v904
    %v912 = vadd.s32 %v851, 4294967224
    %v913 = vlaneseq
    %v914 = vshrl.u32 %v913, 7
    %v915 = vsub.s32 %v912, %v914
    %v916 = vrot.slane %v831, %v915
    %vm917 = vcmask 654912
    %v918 = vsel %vm917, %v916, %v911
    %v919 = vadd.s32 %v851, 4294967216
    %v920 = vlaneseq
    %v921 = vshrl.u32 %v920, 7
    %v922 = vsub.s32 %v919, %v921
    %v923 = vrot.slane %v834, %v922
    %vm924 = vcmask 720512
    %v925 = vsel %vm924, %v923, %v918
    %v926 = vadd.s32 %v851, 4294967208
    %v927 = vlaneseq
    %v928 = vshrl.u32 %v927, 7
    %v929 = vsub.s32 %v926, %v928
    %v930 = vrot.slane %v837, %v929
    %vm931 = vcmask 786112
    %v932 = vsel %vm931, %v930, %v925
    %v933 = vadd.s32 %v851, 4294967200
    %v934 = vlaneseq
    %v935 = vshrl.u32 %v934, 7
    %v936 = vsub.s32 %v933, %v935
    %v937 = vrot.slane %v840, %v936
    %vm938 = vcmask 851712
    %v939 = vsel %vm938, %v937, %v932
    %v940 = vadd.s32 %v851, 4294967192
    %v941 = vlaneseq
    %v942 = vshrl.u32 %v941, 7
    %v943 = vsub.s32 %v940, %v942
    %v944 = vrot.slane %v843, %v943
    %vm945 = vcmask 917312
    %v946 = vsel %vm945, %v944, %v939
    %v947 = vadd.s32 %v851, 4294967184
    %v948 = vlaneseq
    %v949 = vshrl.u32 %v948, 7
    %v950 = vsub.s32 %v947, %v949
    %v951 = vrot.slane %v846, %v950
    %vm952 = vcmask 982912
    %v953 = vsel %vm952, %v951, %v946
    %v954 = vadd.s32 %v851, 4294967176
    %v955 = vlaneseq
    %v956 = vshrl.u32 %v955, 7
    %v957 = vsub.s32 %v954, %v956
    %v958 = vrot.slane %v849, %v957
    %vm959 = vcmask 1048512
    %v960 = vsel %vm959, %v958, %v953
    %962 = vst [vmem:[#allocation8] sm:$0x1] %v960
    // Predicated region
    $region30: #{tpu_custom_call.1} parent=1 // pred_check
      _
    $region31: #{tpu_custom_call.1} parent=1 // pred_check_branch
      %964 = sbr.rel (0) target = $region33
    $region32: #{tpu_custom_call.1} parent=1 // pred_region
      %s966 = ssub.s32 16, 16
      %967 = vsyncadd [#allocation4], %s966
      %s969 = sshll.u32 [#allocation8], 4
      %s970 = int_to_ptr.vmem [resolvable:$true] %s969
      %972 = dma.vmem_to_hbm [thread:$0]  %s970, 16, %s4, [#allocation4]
    $region33: #{tpu_custom_call.1} parent=1 // pred_fallthru
      _
    // Predicated region
    $region34: #{tpu_custom_call.1} parent=1 // pred_check
      _
    $region35: #{tpu_custom_call.1} parent=1 // pred_check_branch
      %974 = sbr.rel (0) target = $region37
    $region36: #{tpu_custom_call.1} parent=1 // pred_region
      %975 = dma.done [#allocation4], 16
    $region37: #{tpu_custom_call.1} parent=1 // pred_fallthru
      _
    %976 = vsyncpa [#allocation3], 1
    %977 = vsyncpa [#allocation6], 1
    %978 = vsyncpa [#allocation4], 1

</llo_original>
